<compile_context>
chip_gen: v7x
topology: tpu7x:2x2x1
jax: 0.10.0
libtpu: 0.0.40
codegen_flags: <defaults>
</compile_context>

<pallas_src>
import jax
import jax.numpy as jnp
from jax.experimental import pallas as pl
from jax.experimental.pallas import tpu as pltpu

BLOCK_ROWS = 2048                 # rows per grid step (multiple of 8): 4 MiB f32 at lane=512
LANE_CHOICES = (512, 256, 128)    # lane-dense last-dim candidates (multiples of 128)
MIN_SPLIT_ROWS = 16               # split into >=2 blocks when possible (v7x dual-TC)


def h_sigmoid_kernel(x_ref, o_ref):
    x = x_ref[...]
    # relu6(x + 3) / 6 ; math in the input dtype (matches PyTorch half-precision
    # hardtanh semantics for bf16), multiply by 1/6 instead of dividing.
    o_ref[...] = (jnp.clip(x + 3.0, 0.0, 6.0) * (1.0 / 6.0)).astype(o_ref.dtype)


def _round_up(n, m):
    return ((n + m - 1) // m) * m


def h_sigmoid(x, *, block_rows=BLOCK_ROWS):
    """Elementwise h_sigmoid over an arbitrarily shaped array."""
    shape, dtype = x.shape, x.dtype
    total = x.size

    if total == 0:
        return x

    # Pick the widest lane count that divides the element count; pad only as a
    # last resort (jnp.pad is an extra full-array HBM round trip).
    lane = None
    for cand in LANE_CHOICES:
        if total % cand == 0:
            lane = cand
            break
    flat = x.reshape(-1)
    if lane is None:
        lane = 128
        flat = jnp.pad(flat, (0, (-total) % lane))
    rows = flat.size // lane
    x2 = flat.reshape(rows, lane)

    # Choose the row-block size.
    if rows < MIN_SPLIT_ROWS:
        # Tiny input: a single block equal to the full array dims is exempt from
        # the (8,128) divisibility rule — avoids over-padding.
        block_rows = rows
    elif rows <= block_rows:
        # Medium input: split into (at least) two row-blocks so both v7x
        # TensorCores get a share of the "parallel" grid axis.
        block_rows = max(8, _round_up(pl.cdiv(rows, 2), 8))
    # else: large input — keep the big (~4 MiB) blocks.

    grid = (pl.cdiv(rows, block_rows),)   # ragged last block is masked by Pallas

    out2 = pl.pallas_call(
        h_sigmoid_kernel,
        out_shape=jax.ShapeDtypeStruct(x2.shape, dtype),
        grid_spec=pltpu.PrefetchScalarGridSpec(
            num_scalar_prefetch=0,
            grid=grid,
            in_specs=[pl.BlockSpec((block_rows, lane), lambda i: (i, 0))],
            out_specs=pl.BlockSpec((block_rows, lane), lambda i: (i, 0)),
        ),
        compiler_params=pltpu.CompilerParams(
            dimension_semantics=("parallel",),
            # v5e scoped-VMEM default is 16 MiB; 4 live 4 MiB buffers need more.
            # 40 MiB also leaves headroom under v7x's 64 MiB physical VMEM.
            vmem_limit_bytes=40 * 1024 * 1024,
        ),
    )(x2)

    out_flat = out2.reshape(-1)
    if out_flat.size != total:          # only slice when we actually padded
        out_flat = out_flat[:total]
    return out_flat.reshape(shape)


def h_sigmoid_reference(x):
    # Mirrors torch: F.relu6(x + 3) / 6
    return jnp.clip(x + 3.0, 0.0, 6.0) / 6.0


if __name__ == "__main__":
    key = jax.random.PRNGKey(0)
    k1, k2, k3, k4 = jax.random.split(key, 4)

    # Shape consistent with conv-net usage in MedViT: (B, C, H, W).
    x1 = jax.random.normal(k1, (2, 4, 16, 16), jnp.float32) * 4.0  # spans the clamp
    y1 = jax.block_until_ready(h_sigmoid(x1))
    assert y1.shape == x1.shape
    assert jnp.allclose(y1, h_sigmoid_reference(x1), atol=1e-6, rtol=1e-6)

    # Multi-block tiled path (rows > block_rows -> grid of 4 steps).
    x2 = jax.random.normal(k2, (2, 8, 32, 32), jnp.float32) * 4.0
    y2 = jax.block_until_ready(h_sigmoid(x2, block_rows=8))
    assert y2.shape == x2.shape
    assert jnp.allclose(y2, h_sigmoid_reference(x2), atol=1e-6, rtol=1e-6)

    # Awkward shape: element count not a multiple of 128 -> pad fallback path.
    x3 = jax.random.normal(k3, (2, 3, 7, 5), jnp.float32) * 4.0
    y3 = jax.block_until_ready(h_sigmoid(x3))
    assert y3.shape == x3.shape
    assert jnp.allclose(y3, h_sigmoid_reference(x3), atol=1e-6, rtol=1e-6)

    # bf16 path: compute stays in bf16 end-to-end (no HBM traffic doubling).
    x4 = (jax.random.normal(k4, (2, 4, 16, 16), jnp.float32) * 4.0).astype(jnp.bfloat16)
    y4 = jax.block_until_ready(h_sigmoid(x4))
    assert y4.shape == x4.shape and y4.dtype == jnp.bfloat16
    assert jnp.allclose(y4.astype(jnp.float32),
                        h_sigmoid_reference(x4.astype(jnp.float32)),
                        atol=2e-2, rtol=2e-2)

    print("KERNEL_OK")
</pallas_src>

<mosaic_0001>
module attributes {stable_mosaic.version = 11 : i64} {
  func.func @h_sigmoid_kernel(%arg0: i32, %arg1: memref<4x512xf32, #tpu.memory_space<vmem>>, %arg2: memref<4x512xf32, #tpu.memory_space<vmem>>) attributes {dimension_semantics = [#tpu.dimension_semantics<parallel>], iteration_bounds = array<i64: 1>, scalar_prefetch = 0 : i64, scratch_operands = 0 : i64, tpu.core_type = #tpu.core_type<tc>, window_params = [{transform_indices = @transform_0, window_bounds = array<i64: 4, 512>}, {transform_indices = @transform_1, window_bounds = array<i64: 4, 512>}]} {
    %c0 = arith.constant 0 : index
    %c0_0 = arith.constant 0 : index
    %0 = vector.load %arg1[%c0, %c0_0] : memref<4x512xf32, #tpu.memory_space<vmem>>, vector<4x512xf32>
    %cst = arith.constant 3.000000e+00 : f32
    %1 = vector.broadcast %cst : f32 to vector<4x512xf32>
    %2 = arith.addf %0, %1 : vector<4x512xf32>
    %cst_1 = arith.constant 0.000000e+00 : f32
    %cst_2 = arith.constant 6.000000e+00 : f32
    %3 = vector.broadcast %cst_1 : f32 to vector<4x512xf32>
    %4 = arith.maximumf %3, %2 : vector<4x512xf32>
    %5 = vector.broadcast %cst_2 : f32 to vector<4x512xf32>
    %6 = arith.minimumf %5, %4 : vector<4x512xf32>
    %cst_3 = arith.constant 0.166666672 : f32
    %7 = vector.broadcast %cst_3 : f32 to vector<4x512xf32>
    %8 = arith.mulf %6, %7 : vector<4x512xf32>
    %c0_4 = arith.constant 0 : index
    %c0_5 = arith.constant 0 : index
    %9 = vector.load %arg2[%c0_4, %c0_5] : memref<4x512xf32, #tpu.memory_space<vmem>>, vector<4x512xf32>
    tpu.vector_store %arg2[%c0_4, %c0_5], %8 {strides = array<i32>} : memref<4x512xf32, #tpu.memory_space<vmem>>, vector<4x512xf32>,
    return
  }
  func.func @transform_0(%arg0: i32) -> (i32, i32) {
    %c0_i32 = arith.constant 0 : i32
    %c0_i32_0 = arith.constant 0 : i32
    return %arg0, %c0_i32 : i32, i32
  }
  func.func @transform_1(%arg0: i32) -> (i32, i32) {
    %c0_i32 = arith.constant 0 : i32
    %c0_i32_0 = arith.constant 0 : i32
    return %arg0, %c0_i32 : i32, i32
  }
}

</mosaic_0001>

<llo_original>
// kernel: tpu_custom_call.1
$region0: #{tpu_custom_call.1}
  #allocation0 [shape = 'u32[]', space=smem, size = 0x4, offset = 0x4, fixed_abs, tag = 'smem constant byte address 0x4 - core index']
  #allocation1 [shape = 'u32[144,128]{1,0:T(1,128)}', space=vmem, size = 0x12000, scoped, tag = 'internal scratch']
  %s0 = inlined_call_operand.hbm [shape: f32[4,512], index: 0, kind: input, shape index: {}]
  %s1 = inlined_call_operand.hbm [shape: f32[4,512], index: 1, kind: output, shape index: {}]
  %s2 = sld [smem:[#allocation0]]
  $region18: #{tpu_custom_call.1} parent=0
    _
  %s4 = ssub.s32 1, %s2
  %s5 = scalar_select 0, %s4, %s2
  $region1: #{tpu_custom_call.1} parent=0
    #allocation2 [shape = 'u8[8192]{0}', space=vmem, size = 0x2000, scoped, tag = 'input window, operand 0, single buffered']
    #allocation3 [shape = 's32[1]{0}', space=sflag, size = 0x4, scoped, tag = 'scoped memory for tpu_custom_call.1']
    #allocation4 [shape = 's32[1]{0}', space=sflag, size = 0x4, scoped, tag = 'scoped memory for tpu_custom_call.1']
    #allocation5 [shape = 'u8[8192]{0}', space=vmem, size = 0x2000, scoped, tag = 'output window, operand 0, single buffered']
    %6 = vsyncpa [#allocation3], 0
    %7 = vsyncpa [#allocation4], 0
    // Predicated region
    $region2: #{tpu_custom_call.1} parent=1 // pred_check
      _
    $region3: #{tpu_custom_call.1} parent=1 // pred_check_branch
      %9 = sbr.rel (0) target = $region5
    $region4: #{tpu_custom_call.1} parent=1 // pred_region
      %s11 = ssub.s32 256, 256
      %12 = vsyncadd [#allocation3], %s11
      %s14 = sshll.u32 [#allocation2], 4
      %s15 = int_to_ptr.vmem [resolvable:$true] %s14
      %17 = dma.hbm_to_vmem [thread:$0]  %s0, 256, %s15, [#allocation3]
    $region5: #{tpu_custom_call.1} parent=1 // pred_fallthru
      _
    // Predicated region
    $region6: #{tpu_custom_call.1} parent=1 // pred_check
      _
    $region7: #{tpu_custom_call.1} parent=1 // pred_check_branch
      %19 = sbr.rel (0) target = $region9
    $region8: #{tpu_custom_call.1} parent=1 // pred_region
      %20 = dma.done [#allocation3], 256
    $region9: #{tpu_custom_call.1} parent=1 // pred_fallthru
      _
    %v21 = vld [vmem:[#allocation2] sm:$0xff]
    %v22 = vld [vmem:[#allocation2 + $0x8] sm:$0xff]
    %v23 = vadd.f32 %v21, 3.0
    %v24 = vadd.f32 %v22, 3.0
    %v25 = vmax.f32 %v23, 0.0
    %v26 = vmax.f32 %v24, 0.0
    %v27 = vmin.f32 %v25, 6.0
    %v28 = vmin.f32 %v26, 6.0
    %v29 = vmul.f32 %v27, 0.16666667
    %v30 = vmul.f32 %v28, 0.16666667
    %31 = vst [vmem:[#allocation5] sm:$0xff] %v29
    %32 = vst [vmem:[#allocation5 + $0x8] sm:$0xff] %v30
    // Predicated region
    $region10: #{tpu_custom_call.1} parent=1 // pred_check
      _
    $region11: #{tpu_custom_call.1} parent=1 // pred_check_branch
      %34 = sbr.rel (0) target = $region13
    $region12: #{tpu_custom_call.1} parent=1 // pred_region
      %s36 = ssub.s32 256, 256
      %37 = vsyncadd [#allocation4], %s36
      %s39 = sshll.u32 [#allocation5], 4
      %s40 = int_to_ptr.vmem [resolvable:$true] %s39
      %42 = dma.vmem_to_hbm [thread:$0]  %s40, 256, %s1, [#allocation4]
    $region13: #{tpu_custom_call.1} parent=1 // pred_fallthru
      _
    // Predicated region
    $region14: #{tpu_custom_call.1} parent=1 // pred_check
      _
    $region15: #{tpu_custom_call.1} parent=1 // pred_check_branch
      %44 = sbr.rel (0) target = $region17
    $region16: #{tpu_custom_call.1} parent=1 // pred_region
      %45 = dma.done [#allocation4], 256
    $region17: #{tpu_custom_call.1} parent=1 // pred_fallthru
      _
    %46 = vsyncpa [#allocation3], 1
    %47 = vsyncpa [#allocation4], 1

</llo_original>
